<compile_context>
chip_gen: v5e
topology: v5e:2x2
jax: 0.10.0
libtpu: 0.0.40
codegen_flags: <defaults>
</compile_context>

<pallas_src>
import functools

import jax
import jax.numpy as jnp
from jax.experimental import pallas as pl
from jax.experimental.pallas import tpu as pltpu


def _conv3x3_sigmoid_kernel(x_ref, w_ref, b_ref, m_ref, o_ref, colmat_ref,
                            *, W, HWp, Cin, Cpad, B):
    # x_ref:      (B, Cin, HWp)   bf16  B images, NCHW with spatial flattened (lane-dense)
    # w_ref:      (Cout, 9*Cpad)  bf16  permuted + per-tap-padded conv weight (resident)
    # b_ref:      (Cout, 1)       f32   bias (broadcasts over lanes)
    # m_ref:      (8, HWp)        f32   multiplicative boundary masks, non-center taps (resident)
    # o_ref:      (B, Cout, HWp)  out   lane-dense output
    # colmat_ref: (9*Cpad, HWp)   bf16  scratch im2col slab (reused per image)

    # Zero the scratch so the (Cpad - Cin) pad rows of every tap block contribute
    # exactly 0 to the matmul.  Done every step (cheap: ~20 vregs) so the kernel has
    # no cross-step state and is safe under megacore grid sharding.
    colmat_ref[...] = jnp.zeros_like(colmat_ref)

    masks = m_ref[...]                       # (8, HWp) f32, stays resident in VMEM

    # Static tap table: (tap index, flattened-lane offset).
    taps = []
    ti = 0
    for dh in (-1, 0, 1):
        for dw in (-1, 0, 1):
            taps.append((ti, dh * W + dw))
            ti += 1

    for b in range(B):                       # images per grid step (static unroll)
        # f32 elementwise assembly (v5e has no bf16 VALU; bf16 transport already
        # saved the HBM bytes).  One upcast per image.
        x = x_ref[b].astype(jnp.float32)     # (Cin, HWp)

        mi = 0
        for t, off in taps:
            if off == 0:
                slab = x                                           # center tap: no mask
            else:
                rolled = pltpu.roll(x, shift=(-off) % HWp, axis=1)  # XLU lane roll
                slab = rolled * masks[mi:mi + 1, :]                 # 1 vmul per tap
                mi += 1
            # Aligned write: tap t occupies rows [t*Cpad, t*Cpad + Cin).
            colmat_ref[pl.ds(t * Cpad, Cin), :] = slab.astype(jnp.bfloat16)

        # Single fused MXU matmul per image: (Cout, Kpad) x (Kpad, HWp), f32 accum.
        acc = jnp.dot(w_ref[...], colmat_ref[...],
                      preferred_element_type=jnp.float32)           # (Cout, HWp)

        # Bias + sigmoid in f32 (EUP), lane-dense store.
        y = jax.nn.sigmoid(acc + b_ref[...])
        o_ref[b] = y.astype(o_ref.dtype)


def _make_tap_masks(H, W, HWp):
    """Multiplicative boundary masks (8, HWp) for the 8 non-center 3x3 taps."""
    HW = H * W
    p = jnp.arange(HWp, dtype=jnp.int32)
    row = p // W
    col = p % W
    inside = p < HW
    rows_m = []
    for dh in (-1, 0, 1):
        for dw in (-1, 0, 1):
            if dh == 0 and dw == 0:
                continue
            ok = (inside & (row + dh >= 0) & (row + dh < H)
                  & (col + dw >= 0) & (col + dw < W))
            rows_m.append(ok)
    return jnp.stack(rows_m, axis=0).astype(jnp.float32)


def _pick_batch_per_step(N, per_image_bytes):
    """Images per grid step: amortize per-step overhead, keep grid >= 2 (v7x), fit VMEM."""
    if N <= 1:
        return 1
    vmem_budget = 4 << 20                              # per-step block budget (double-buffered)
    bmax = max(1, vmem_budget // max(per_image_bytes, 1))
    b = min(max(1, N // 2), bmax)                      # keep at least 2 grid steps
    while N % b:                                       # largest divisor of N <= b
        b -= 1
    return b


def conv3x3_sigmoid(x_nchw, w_oihw, bias, *, out_dtype=jnp.float32):
    """Conv2d(3x3, stride=1, pad=1) + sigmoid via Pallas.  Returns NCHW in out_dtype."""
    N, Cin, H, W = x_nchw.shape
    Cout = w_oihw.shape[0]
    HW = H * W
    HWp = ((HW + 127) // 128) * 128                    # lane-dense output width
    Cpad = ((Cin + 15) // 16) * 16                     # bf16 sublane-tile aligned tap blocks
    Kpad = 9 * Cpad

    # Activation: free reshape + bf16 transport (halves input DMA bytes).
    x_flat = x_nchw.reshape(N, Cin, HW).astype(jnp.bfloat16)
    if HWp != HW:
        x_flat = jnp.pad(x_flat, ((0, 0), (0, 0), (0, HWp - HW)))

    # Parameter prep (OIHW -> (Cout, 9, Cin) -> per-tap pad to Cpad -> (Cout, 9*Cpad), bf16)
    # and the mask table.  NOTE: these are tiny, constant-fold under jit, and can be
    # hoisted/cached at module init for non-jit callers.
    w2 = jnp.transpose(w_oihw, (0, 2, 3, 1)).reshape(Cout, 9, Cin).astype(jnp.float32)
    w2 = jnp.pad(w2, ((0, 0), (0, 0), (0, Cpad - Cin))).reshape(Cout, Kpad)
    w2 = w2.astype(jnp.bfloat16)
    b2 = bias.reshape(Cout, 1).astype(jnp.float32)
    masks = _make_tap_masks(H, W, HWp)                 # (8, HWp) f32

    per_image_bytes = 2 * (Cin * HWp * 2 + Cout * HWp * jnp.dtype(out_dtype).itemsize)
    B = _pick_batch_per_step(N, per_image_bytes)
    grid = (N // B,)

    kernel = functools.partial(_conv3x3_sigmoid_kernel,
                               W=W, HWp=HWp, Cin=Cin, Cpad=Cpad, B=B)

    out = pl.pallas_call(
        kernel,
        out_shape=jax.ShapeDtypeStruct((N, Cout, HWp), out_dtype),
        grid_spec=pltpu.PrefetchScalarGridSpec(
            num_scalar_prefetch=0,
            grid=grid,
            in_specs=[
                pl.BlockSpec((B, Cin, HWp), lambda n: (n, 0, 0)),
                pl.BlockSpec((Cout, Kpad), lambda n: (0, 0)),   # resident
                pl.BlockSpec((Cout, 1), lambda n: (0, 0)),      # resident
                pl.BlockSpec((8, HWp), lambda n: (0, 0)),       # resident mask table
            ],
            out_specs=pl.BlockSpec((B, Cout, HWp), lambda n: (n, 0, 0)),
            scratch_shapes=[pltpu.VMEM((Kpad, HWp), jnp.bfloat16)],
        ),
        compiler_params=pltpu.CompilerParams(
            dimension_semantics=("parallel",),
            vmem_limit_bytes=32 * 1024 * 1024,
        ),
    )(x_flat, w2, b2, masks)

    if HWp != HW:
        out = out[..., :HW]                            # crop lane padding
    return out.reshape(N, Cout, H, W)                  # free reshape (split last dim)


def nearest_resize_nchw(x, out_h, out_w):
    """torch.nn.functional.interpolate(mode='nearest') semantics (integer index math)."""
    N, C, H, W = x.shape
    if out_h == H and out_w == W:                      # identity (square inputs): skip gather
        return x
    # TODO(synk): fuse non-identity nearest resize into the Pallas kernel (scalar-prefetched
    # index table driving the output index_map) to avoid two extra XLA gather HBM passes.
    hi = (jnp.arange(out_h, dtype=jnp.int32) * H) // out_h
    wi = (jnp.arange(out_w, dtype=jnp.int32) * W) // out_w
    return x[:, :, hi, :][:, :, :, wi]


def bilinear_module_forward(x_nchw, w_oihw, bias):
    y = conv3x3_sigmoid(x_nchw, w_oihw, bias)
    # F.interpolate(x, x.shape[2]) -> resize spatial dims to (H, H), nearest.
    target = x_nchw.shape[2]
    return nearest_resize_nchw(y, target, target)


def _reference(x_nchw, w_oihw, bias):
    # Reference with the same bf16-rounded operands as the kernel's MXU feed,
    # f32 accumulation -> differences are only f32 summation-order noise.
    xb = x_nchw.astype(jnp.bfloat16).astype(jnp.float32)
    wb = w_oihw.astype(jnp.bfloat16).astype(jnp.float32)
    y = jax.lax.conv_general_dilated(
        xb, wb, window_strides=(1, 1), padding=((1, 1), (1, 1)),
        dimension_numbers=("NCHW", "OIHW", "NCHW"))
    y = jax.nn.sigmoid(y + bias.reshape(1, -1, 1, 1).astype(jnp.float32))
    t = x_nchw.shape[2]
    return nearest_resize_nchw(y, t, t)


if __name__ == "__main__":
    key = jax.random.PRNGKey(0)
    k_x, k_w, k_b = jax.random.split(key, 3)

    N, Cin, Cout, H, W = 2, 4, 4, 16, 16
    x = jax.random.normal(k_x, (N, Cin, H, W), dtype=jnp.float32)
    # Deterministic synthetic parameters (Conv2d(in_chan, out_chan, 3) shapes).
    fan_in = Cin * 3 * 3
    bound = 1.0 / (fan_in ** 0.5)
    w = jax.random.uniform(k_w, (Cout, Cin, 3, 3), minval=-bound, maxval=bound,
                           dtype=jnp.float32)
    b = jax.random.uniform(k_b, (Cout,), minval=-bound, maxval=bound,
                           dtype=jnp.float32)

    out = jax.block_until_ready(bilinear_module_forward(x, w, b))
    ref = jax.block_until_ready(_reference(x, w, b))

    assert out.shape == (N, Cout, H, H), out.shape
    assert jnp.allclose(out, ref, atol=1e-4, rtol=1e-4), "mismatch vs reference"
    print("KERNEL_OK")
</pallas_src>

<mosaic_0001>
module attributes {stable_mosaic.version = 11 : i64} {
  func.func @_conv3x3_sigmoid_kernel(%arg0: i32, %arg1: memref<1x4x256xbf16, #tpu.memory_space<vmem>>, %arg2: memref<4x144xbf16, #tpu.memory_space<vmem>>, %arg3: memref<4x1xf32, #tpu.memory_space<vmem>>, %arg4: memref<8x256xf32, #tpu.memory_space<vmem>>, %arg5: memref<1x4x256xf32, #tpu.memory_space<vmem>>, %arg6: memref<144x256xbf16, #tpu.memory_space<vmem>>) attributes {dimension_semantics = [#tpu.dimension_semantics<parallel>], iteration_bounds = array<i64: 2>, scalar_prefetch = 0 : i64, scratch_operands = 1 : i64, tpu.core_type = #tpu.core_type<tc>, window_params = [{transform_indices = @transform_0, window_bounds = array<i64: 1, 4, 256>}, {pipeline_mode = #tpu.pipeline_mode<synchronous>, transform_indices = @transform_1, window_bounds = array<i64: 4, 144>}, {pipeline_mode = #tpu.pipeline_mode<synchronous>, transform_indices = @transform_2, window_bounds = array<i64: 4, 1>}, {pipeline_mode = #tpu.pipeline_mode<synchronous>, transform_indices = @transform_3, window_bounds = array<i64: 8, 256>}, {transform_indices = @transform_4, window_bounds = array<i64: 1, 4, 256>}]} {
    %cst = arith.constant 0.000000e+00 : bf16
    %0 = vector.broadcast %cst : bf16 to vector<144x256xbf16>
    %c0 = arith.constant 0 : index
    %c0_0 = arith.constant 0 : index
    %1 = vector.load %arg6[%c0, %c0_0] : memref<144x256xbf16, #tpu.memory_space<vmem>>, vector<144x256xbf16>
    tpu.vector_store %arg6[%c0, %c0_0], %0 {strides = array<i32>} : memref<144x256xbf16, #tpu.memory_space<vmem>>, vector<144x256xbf16>,
    %c0_1 = arith.constant 0 : index
    %c0_2 = arith.constant 0 : index
    %2 = vector.load %arg4[%c0_1, %c0_2] : memref<8x256xf32, #tpu.memory_space<vmem>>, vector<8x256xf32>
    %c0_3 = arith.constant 0 : index
    %c0_4 = arith.constant 0 : index
    %c0_5 = arith.constant 0 : index
    %3 = vector.load %arg1[%c0_3, %c0_4, %c0_5] : memref<1x4x256xbf16, #tpu.memory_space<vmem>>, vector<1x4x256xbf16>
    %4 = vector.shape_cast %3 : vector<1x4x256xbf16> to vector<4x256xbf16>
    %5 = arith.extf %4 : vector<4x256xbf16> to vector<4x256xf32>
    %c17_i32 = arith.constant 17 : i32
    %6 = tpu.dynamic_rotate %5 by %c17_i32 dim 1 : vector<4x256xf32>, i32 -> vector<4x256xf32>
    %7 = vector.extract_strided_slice %2 {offsets = [0, 0], sizes = [1, 256], strides = [1, 1]} : vector<8x256xf32> to vector<1x256xf32>
    %8 = vector.broadcast %7 : vector<1x256xf32> to vector<4x256xf32>
    %9 = arith.mulf %6, %8 : vector<4x256xf32>
    %10 = arith.truncf %9 : vector<4x256xf32> to vector<4x256xbf16>
    %c0_6 = arith.constant 0 : index
    %c0_7 = arith.constant 0 : index
    %11 = vector.load %arg6[%c0_6, %c0_7] : memref<144x256xbf16, #tpu.memory_space<vmem>>, vector<4x256xbf16>
    tpu.vector_store %arg6[%c0_6, %c0_7], %10 {strides = array<i32>} : memref<144x256xbf16, #tpu.memory_space<vmem>>, vector<4x256xbf16>,
    %c16_i32 = arith.constant 16 : i32
    %12 = tpu.dynamic_rotate %5 by %c16_i32 dim 1 : vector<4x256xf32>, i32 -> vector<4x256xf32>
    %13 = vector.extract_strided_slice %2 {offsets = [1, 0], sizes = [1, 256], strides = [1, 1]} : vector<8x256xf32> to vector<1x256xf32>
    %14 = vector.broadcast %13 : vector<1x256xf32> to vector<4x256xf32>
    %15 = arith.mulf %12, %14 : vector<4x256xf32>
    %16 = arith.truncf %15 : vector<4x256xf32> to vector<4x256xbf16>
    %c16 = arith.constant 16 : index
    %c0_8 = arith.constant 0 : index
    %17 = vector.load %arg6[%c16, %c0_8] : memref<144x256xbf16, #tpu.memory_space<vmem>>, vector<4x256xbf16>
    tpu.vector_store %arg6[%c16, %c0_8], %16 {strides = array<i32>} : memref<144x256xbf16, #tpu.memory_space<vmem>>, vector<4x256xbf16>,
    %c15_i32 = arith.constant 15 : i32
    %18 = tpu.dynamic_rotate %5 by %c15_i32 dim 1 : vector<4x256xf32>, i32 -> vector<4x256xf32>
    %19 = vector.extract_strided_slice %2 {offsets = [2, 0], sizes = [1, 256], strides = [1, 1]} : vector<8x256xf32> to vector<1x256xf32>
    %20 = vector.broadcast %19 : vector<1x256xf32> to vector<4x256xf32>
    %21 = arith.mulf %18, %20 : vector<4x256xf32>
    %22 = arith.truncf %21 : vector<4x256xf32> to vector<4x256xbf16>
    %c32 = arith.constant 32 : index
    %c0_9 = arith.constant 0 : index
    %23 = vector.load %arg6[%c32, %c0_9] : memref<144x256xbf16, #tpu.memory_space<vmem>>, vector<4x256xbf16>
    tpu.vector_store %arg6[%c32, %c0_9], %22 {strides = array<i32>} : memref<144x256xbf16, #tpu.memory_space<vmem>>, vector<4x256xbf16>,
    %c1_i32 = arith.constant 1 : i32
    %24 = tpu.dynamic_rotate %5 by %c1_i32 dim 1 : vector<4x256xf32>, i32 -> vector<4x256xf32>
    %25 = vector.extract_strided_slice %2 {offsets = [3, 0], sizes = [1, 256], strides = [1, 1]} : vector<8x256xf32> to vector<1x256xf32>
    %26 = vector.broadcast %25 : vector<1x256xf32> to vector<4x256xf32>
    %27 = arith.mulf %24, %26 : vector<4x256xf32>
    %28 = arith.truncf %27 : vector<4x256xf32> to vector<4x256xbf16>
    %c48 = arith.constant 48 : index
    %c0_10 = arith.constant 0 : index
    %29 = vector.load %arg6[%c48, %c0_10] : memref<144x256xbf16, #tpu.memory_space<vmem>>, vector<4x256xbf16>
    tpu.vector_store %arg6[%c48, %c0_10], %28 {strides = array<i32>} : memref<144x256xbf16, #tpu.memory_space<vmem>>, vector<4x256xbf16>,
    %30 = arith.truncf %5 : vector<4x256xf32> to vector<4x256xbf16>
    %c64 = arith.constant 64 : index
    %c0_11 = arith.constant 0 : index
    %31 = vector.load %arg6[%c64, %c0_11] : memref<144x256xbf16, #tpu.memory_space<vmem>>, vector<4x256xbf16>
    tpu.vector_store %arg6[%c64, %c0_11], %30 {strides = array<i32>} : memref<144x256xbf16, #tpu.memory_space<vmem>>, vector<4x256xbf16>,
    %c255_i32 = arith.constant 255 : i32
    %32 = tpu.dynamic_rotate %5 by %c255_i32 dim 1 : vector<4x256xf32>, i32 -> vector<4x256xf32>
    %33 = vector.extract_strided_slice %2 {offsets = [4, 0], sizes = [1, 256], strides = [1, 1]} : vector<8x256xf32> to vector<1x256xf32>
    %34 = vector.broadcast %33 : vector<1x256xf32> to vector<4x256xf32>
    %35 = arith.mulf %32, %34 : vector<4x256xf32>
    %36 = arith.truncf %35 : vector<4x256xf32> to vector<4x256xbf16>
    %c80 = arith.constant 80 : index
    %c0_12 = arith.constant 0 : index
    %37 = vector.load %arg6[%c80, %c0_12] : memref<144x256xbf16, #tpu.memory_space<vmem>>, vector<4x256xbf16>
    tpu.vector_store %arg6[%c80, %c0_12], %36 {strides = array<i32>} : memref<144x256xbf16, #tpu.memory_space<vmem>>, vector<4x256xbf16>,
    %c241_i32 = arith.constant 241 : i32
    %38 = tpu.dynamic_rotate %5 by %c241_i32 dim 1 : vector<4x256xf32>, i32 -> vector<4x256xf32>
    %39 = vector.extract_strided_slice %2 {offsets = [5, 0], sizes = [1, 256], strides = [1, 1]} : vector<8x256xf32> to vector<1x256xf32>
    %40 = vector.broadcast %39 : vector<1x256xf32> to vector<4x256xf32>
    %41 = arith.mulf %38, %40 : vector<4x256xf32>
    %42 = arith.truncf %41 : vector<4x256xf32> to vector<4x256xbf16>
    %c96 = arith.constant 96 : index
    %c0_13 = arith.constant 0 : index
    %43 = vector.load %arg6[%c96, %c0_13] : memref<144x256xbf16, #tpu.memory_space<vmem>>, vector<4x256xbf16>
    tpu.vector_store %arg6[%c96, %c0_13], %42 {strides = array<i32>} : memref<144x256xbf16, #tpu.memory_space<vmem>>, vector<4x256xbf16>,
    %c240_i32 = arith.constant 240 : i32
    %44 = tpu.dynamic_rotate %5 by %c240_i32 dim 1 : vector<4x256xf32>, i32 -> vector<4x256xf32>
    %45 = vector.extract_strided_slice %2 {offsets = [6, 0], sizes = [1, 256], strides = [1, 1]} : vector<8x256xf32> to vector<1x256xf32>
    %46 = vector.broadcast %45 : vector<1x256xf32> to vector<4x256xf32>
    %47 = arith.mulf %44, %46 : vector<4x256xf32>
    %48 = arith.truncf %47 : vector<4x256xf32> to vector<4x256xbf16>
    %c112 = arith.constant 112 : index
    %c0_14 = arith.constant 0 : index
    %49 = vector.load %arg6[%c112, %c0_14] : memref<144x256xbf16, #tpu.memory_space<vmem>>, vector<4x256xbf16>
    tpu.vector_store %arg6[%c112, %c0_14], %48 {strides = array<i32>} : memref<144x256xbf16, #tpu.memory_space<vmem>>, vector<4x256xbf16>,
    %c239_i32 = arith.constant 239 : i32
    %50 = tpu.dynamic_rotate %5 by %c239_i32 dim 1 : vector<4x256xf32>, i32 -> vector<4x256xf32>
    %51 = vector.extract_strided_slice %2 {offsets = [7, 0], sizes = [1, 256], strides = [1, 1]} : vector<8x256xf32> to vector<1x256xf32>
    %52 = vector.broadcast %51 : vector<1x256xf32> to vector<4x256xf32>
    %53 = arith.mulf %50, %52 : vector<4x256xf32>
    %54 = arith.truncf %53 : vector<4x256xf32> to vector<4x256xbf16>
    %c128 = arith.constant 128 : index
    %c0_15 = arith.constant 0 : index
    %55 = vector.load %arg6[%c128, %c0_15] : memref<144x256xbf16, #tpu.memory_space<vmem>>, vector<4x256xbf16>
    tpu.vector_store %arg6[%c128, %c0_15], %54 {strides = array<i32>} : memref<144x256xbf16, #tpu.memory_space<vmem>>, vector<4x256xbf16>,
    %c0_16 = arith.constant 0 : index
    %c0_17 = arith.constant 0 : index
    %56 = vector.load %arg2[%c0_16, %c0_17] : memref<4x144xbf16, #tpu.memory_space<vmem>>, vector<4x144xbf16>
    %c0_18 = arith.constant 0 : index
    %c0_19 = arith.constant 0 : index
    %57 = vector.load %arg6[%c0_18, %c0_19] : memref<144x256xbf16, #tpu.memory_space<vmem>>, vector<144x256xbf16>
    %cst_20 = arith.constant dense<0.000000e+00> : vector<4x256xf32>
    %58 = tpu.matmul %56, %57, %cst_20 {dimension_numbers = #tpu.dot_dimension_numbers<[1], [0], [0], [1], [0, 0, 1, 1], [], []>} : vector<4x144xbf16>, vector<144x256xbf16>, vector<4x256xf32> -> vector<4x256xf32>
    %c0_21 = arith.constant 0 : index
    %c0_22 = arith.constant 0 : index
    %59 = vector.load %arg3[%c0_21, %c0_22] : memref<4x1xf32, #tpu.memory_space<vmem>>, vector<4x1xf32>
    %60 = vector.broadcast %59 : vector<4x1xf32> to vector<4x256xf32>
    %61 = arith.addf %58, %60 : vector<4x256xf32>
    %62 = arith.negf %61 : vector<4x256xf32>
    %63 = math.exp %62 : vector<4x256xf32>
    %cst_23 = arith.constant 1.000000e+00 : f32
    %64 = vector.broadcast %cst_23 : f32 to vector<4x256xf32>
    %65 = arith.addf %64, %63 : vector<4x256xf32>
    %66 = arith.divf %64, %65 : vector<4x256xf32>
    %c0_24 = arith.constant 0 : index
    %c0_25 = arith.constant 0 : index
    %c0_26 = arith.constant 0 : index
    %67 = vector.load %arg5[%c0_24, %c0_25, %c0_26] : memref<1x4x256xf32, #tpu.memory_space<vmem>>, vector<1x4x256xf32>
    %68 = vector.shape_cast %67 : vector<1x4x256xf32> to vector<4x256xf32>
    %69 = vector.shape_cast %66 : vector<4x256xf32> to vector<1x4x256xf32>
    tpu.vector_store %arg5[%c0_24, %c0_25, %c0_26], %69 {strides = array<i32>} : memref<1x4x256xf32, #tpu.memory_space<vmem>>, vector<1x4x256xf32>,
    return
  }
  func.func @transform_0(%arg0: i32) -> (i32, i32, i32) {
    %c0_i32 = arith.constant 0 : i32
    %c0_i32_0 = arith.constant 0 : i32
    %c0_i32_1 = arith.constant 0 : i32
    return %arg0, %c0_i32, %c0_i32_0 : i32, i32, i32
  }
  func.func @transform_1(%arg0: i32) -> (i32, i32) {
    %c0_i32 = arith.constant 0 : i32
    %c0_i32_0 = arith.constant 0 : i32
    %c0_i32_1 = arith.constant 0 : i32
    return %c0_i32, %c0_i32_0 : i32, i32
  }
  func.func @transform_2(%arg0: i32) -> (i32, i32) {
    %c0_i32 = arith.constant 0 : i32
    %c0_i32_0 = arith.constant 0 : i32
    %c0_i32_1 = arith.constant 0 : i32
    return %c0_i32, %c0_i32_0 : i32, i32
  }
  func.func @transform_3(%arg0: i32) -> (i32, i32) {
    %c0_i32 = arith.constant 0 : i32
    %c0_i32_0 = arith.constant 0 : i32
    %c0_i32_1 = arith.constant 0 : i32
    return %c0_i32, %c0_i32_0 : i32, i32
  }
  func.func @transform_4(%arg0: i32) -> (i32, i32, i32) {
    %c0_i32 = arith.constant 0 : i32
    %c0_i32_0 = arith.constant 0 : i32
    %c0_i32_1 = arith.constant 0 : i32
    return %arg0, %c0_i32, %c0_i32_0 : i32, i32, i32
  }
}

</mosaic_0001>

<llo_original>
// kernel: tpu_custom_call.1
$region0: #{tpu_custom_call.1}
  #allocation0 [shape = 'u32[]', space=smem, size = 0x4, offset = 0x4, fixed_abs, tag = 'smem constant byte address 0x4 - core index']
  #allocation1 [shape = 'u32[72,128]{1,0:T(1,128)}', space=vmem, size = 0x9000, scoped, tag = 'internal scratch']
  #allocation2 [shape = 'bf16[144,256]{1,0:T(8,128)(2,1)}', space=vmem, size = 0x12000, scoped, tag = 'scratch operand']
  %s0 = inlined_call_operand.hbm [shape: bf16[2,4,256], index: 0, kind: input, shape index: {}]
  %s1 = inlined_call_operand.vmem [shape: bf16[4,144], index: 1, kind: input, shape index: {}]
  %s2 = inlined_call_operand.vmem [shape: f32[4,1], index: 2, kind: input, shape index: {}]
  %s3 = inlined_call_operand.hbm [shape: f32[8,256], index: 3, kind: input, shape index: {}]
  %s4 = inlined_call_operand.hbm [shape: f32[2,4,256], index: 4, kind: output, shape index: {}]
  %s5 = sld [smem:[#allocation0]]
  $region57: #{tpu_custom_call.1} parent=0
    _
  %s7 = ssub.s32 1, %s5
  %s8 = scalar_select 0, %s7, %s5
  $region1: #{tpu_custom_call.1} parent=0
    #allocation3 [shape = 'u8[4096]{0}', space=vmem, size = 0x1000, scoped, tag = 'input window, operand 0']
    #allocation4 [shape = 's32[2]{0}', space=sflag, size = 0x8, scoped, tag = 'scoped memory for tpu_custom_call.1']
    #allocation5 [shape = 's32[2]{0}', space=sflag, size = 0x8, scoped, tag = 'scoped memory for tpu_custom_call.1']
    #allocation6 [shape = 'u8[8192]{0}', space=vmem, size = 0x2000, scoped, tag = 'input window, operand 3, single buffered']
    #allocation7 [shape = 's32[1]{0}', space=sflag, size = 0x4, scoped, tag = 'scoped memory for tpu_custom_call.1']
    #allocation8 [shape = 'u8[8192]{0}', space=vmem, size = 0x2000, scoped, tag = 'output window, operand 0']
    %9 = vsyncpa [#allocation4], 0
    %s10 = scalar_lea.sflag [#allocation4], 1
    %11 = vsyncpa %s10, 0
    %12 = vsyncpa [#allocation7], 0
    %13 = vsyncpa [#allocation5], 0
    %s14 = scalar_lea.sflag [#allocation5], 1
    %15 = vsyncpa %s14, 0
    loop: start=0, step=1, limit=4
    $region2: #{tpu_custom_call.1} parent=1 // loop_pre_header
      _
    $region3: #{tpu_custom_call.1} parent=1 // loop_header
      %s17 = sphi 0, %s21
      %p18 = scmp.ge.s32.totalorder %s17, 4
      %s27 = sphi 0, %s29
      %s30 = sphi 0, %s27
      %s31 = sphi 0, %s30
      %s47 = sphi 0, %s31
      %s51 = sphi 0, %s51
      %s53 = sphi 0, %s51
      %s54 = sphi 0, %s53
      %s68 = sphi 0, %s54
      %s72 = sphi 0, %s72
      %s74 = sphi 0, %s72
      %s75 = sphi 0, %s74
      %s89 = sphi 0, %s75
      %s93 = sphi 0, %s93
      %s95 = sphi 0, %s93
      %s96 = sphi 0, %s95
      %s110 = sphi 0, %s96
      %s116 = sphi 0, %s118
      %s119 = sphi 0, %s116
      %s120 = sphi 0, %s119
      %s136 = sphi 0, %s120
    $region4: #{tpu_custom_call.1} parent=1 // loop_header_branch
      %20 = sbr.rel (%p18) target = $region8
    $region5: #{tpu_custom_call.1} parent=1 // loop_body
      %s22 = ssub.s32 %s17, 1
      %s23 = ssub.s32 %s17, 2
      %s24 = sadd.s32 %s17, 1
      %s25 = ssub.s32 %s17, %s24
      %p26 = scmp.eq.s32.totalorder %s25, 0
      %s28 = sadd.s32 %s27, 1
      %s29 = scalar_select %p26, %s27, %s28
      %p32 = pneg %p26
      %p33 = scmp.eq.s32.totalorder %s17, 1
      %p34 = por %p32, %p33
      %p35 = scmp.ne.s32.totalorder %s27, %s30
      %p36 = scmp.eq.s32.totalorder %s17, 0
      %p37 = por %p35, %p36
      %p38 = scmp.ne.s32.totalorder %s27, %s30
      %p39 = scmp.eq.s32.totalorder %s22, 1
      %p40 = por %p38, %p39
      %p41 = scmp.ne.s32.totalorder %s30, %s31
      %p42 = scmp.eq.s32.totalorder %s22, 0
      %p43 = por %p41, %p42
      %p44 = scmp.ne.s32.totalorder %s30, %s31
      %p45 = scmp.eq.s32.totalorder %s23, 1
      %p46 = por %p44, %p45
      %p48 = scmp.ne.s32.totalorder %s31, %s47
      %p49 = scmp.eq.s32.totalorder %s23, 0
      %p50 = por %p48, %p49
      %s52 = sadd.s32 %s51, 1
      %p55 = scmp.eq.s32.totalorder %s17, 1
      %p56 = scmp.ne.s32.totalorder %s51, %s53
      %p57 = scmp.eq.s32.totalorder %s17, 0
      %p58 = por %p56, %p57
      %p59 = scmp.ne.s32.totalorder %s51, %s53
      %p60 = scmp.eq.s32.totalorder %s22, 1
      %p61 = por %p59, %p60
      %p62 = scmp.ne.s32.totalorder %s53, %s54
      %p63 = scmp.eq.s32.totalorder %s22, 0
      %p64 = por %p62, %p63
      %p65 = scmp.ne.s32.totalorder %s53, %s54
      %p66 = scmp.eq.s32.totalorder %s23, 1
      %p67 = por %p65, %p66
      %p69 = scmp.ne.s32.totalorder %s54, %s68
      %p70 = scmp.eq.s32.totalorder %s23, 0
      %p71 = por %p69, %p70
      %s73 = sadd.s32 %s72, 1
      %p76 = scmp.eq.s32.totalorder %s17, 1
      %p77 = scmp.ne.s32.totalorder %s72, %s74
      %p78 = scmp.eq.s32.totalorder %s17, 0
      %p79 = por %p77, %p78
      %p80 = scmp.ne.s32.totalorder %s72, %s74
      %p81 = scmp.eq.s32.totalorder %s22, 1
      %p82 = por %p80, %p81
      %p83 = scmp.ne.s32.totalorder %s74, %s75
      %p84 = scmp.eq.s32.totalorder %s22, 0
      %p85 = por %p83, %p84
      %p86 = scmp.ne.s32.totalorder %s74, %s75
      %p87 = scmp.eq.s32.totalorder %s23, 1
      %p88 = por %p86, %p87
      %p90 = scmp.ne.s32.totalorder %s75, %s89
      %p91 = scmp.eq.s32.totalorder %s23, 0
      %p92 = por %p90, %p91
      %s94 = sadd.s32 %s93, 1
      %p97 = scmp.eq.s32.totalorder %s17, 1
      %p98 = scmp.ne.s32.totalorder %s93, %s95
      %p99 = scmp.eq.s32.totalorder %s17, 0
      %p100 = por %p98, %p99
      %p101 = scmp.ne.s32.totalorder %s93, %s95
      %p102 = scmp.eq.s32.totalorder %s22, 1
      %p103 = por %p101, %p102
      %p104 = scmp.ne.s32.totalorder %s95, %s96
      %p105 = scmp.eq.s32.totalorder %s22, 0
      %p106 = por %p104, %p105
      %p107 = scmp.ne.s32.totalorder %s95, %s96
      %p108 = scmp.eq.s32.totalorder %s23, 1
      %p109 = por %p107, %p108
      %p111 = scmp.ne.s32.totalorder %s96, %s110
      %p112 = scmp.eq.s32.totalorder %s23, 0
      %p113 = por %p111, %p112
      %s114 = ssub.s32 %s17, %s24
      %p115 = scmp.eq.s32.totalorder %s114, 0
      %s117 = sadd.s32 %s116, 1
      %s118 = scalar_select %p115, %s116, %s117
      %p121 = pneg %p115
      %p122 = scmp.eq.s32.totalorder %s17, 1
      %p123 = por %p121, %p122
      %p124 = scmp.ne.s32.totalorder %s116, %s119
      %p125 = scmp.eq.s32.totalorder %s17, 0
      %p126 = por %p124, %p125
      %p127 = scmp.ne.s32.totalorder %s116, %s119
      %p128 = scmp.eq.s32.totalorder %s22, 1
      %p129 = por %p127, %p128
      %p130 = scmp.ne.s32.totalorder %s119, %s120
      %p131 = scmp.eq.s32.totalorder %s22, 0
      %p132 = por %p130, %p131
      %p133 = scmp.ne.s32.totalorder %s119, %s120
      %p134 = scmp.eq.s32.totalorder %s23, 1
      %p135 = por %p133, %p134
      %p137 = scmp.ne.s32.totalorder %s120, %s136
      %p138 = scmp.eq.s32.totalorder %s23, 0
      %p139 = por %p137, %p138
      %p140 = scmp.le.s32.totalorder 1, %s17
      %p141 = scmp.lt.s32.totalorder %s17, 3
      %p142 = pnand %p140, %p141
      %p143 = pneg %p142
      // Predicated region
      $region9: #{tpu_custom_call.1} parent=5 // pred_check
        _
      $region10: #{tpu_custom_call.1} parent=5 // pred_check_branch
        %145 = sbr.rel (%p142) target = $region12
      $region11: #{tpu_custom_call.1} parent=5 // pred_region
        %s146 = ssub.s32 %s17, 1
        // Predicated region
        $region13: #{tpu_custom_call.1} parent=11 // pred_check
          %p147 = pneg %p64
        $region14: #{tpu_custom_call.1} parent=11 // pred_check_branch
          %149 = sbr.rel (%p147) target = $region16
        $region15: #{tpu_custom_call.1} parent=11 // pred_region
          _
        $region16: #{tpu_custom_call.1} parent=11 // pred_fallthru
          _
        // Predicated region
        $region17: #{tpu_custom_call.1} parent=11 // pred_check
          %p150 = pneg %p85
        $region18: #{tpu_custom_call.1} parent=11 // pred_check_branch
          %152 = sbr.rel (%p150) target = $region20
        $region19: #{tpu_custom_call.1} parent=11 // pred_region
          _
        $region20: #{tpu_custom_call.1} parent=11 // pred_fallthru
          _
        // Predicated region
        $region21: #{tpu_custom_call.1} parent=11 // pred_check
          %p153 = pneg %p106
        $region22: #{tpu_custom_call.1} parent=11 // pred_check_branch
          %155 = sbr.rel (%p153) target = $region24
        $region23: #{tpu_custom_call.1} parent=11 // pred_region
          %157 = vsyncadd [#allocation7], 0
          %s159 = sshll.u32 %s3, 4
          %s160 = int_to_ptr.hbm [resolvable:$true] %s159
          %s161 = sshll.u32 [#allocation6], 4
          %s162 = int_to_ptr.vmem [resolvable:$true] %s161
          %164 = dma.hbm_to_vmem [thread:$0]  %s160, 256, %s162, [#allocation7]
        $region24: #{tpu_custom_call.1} parent=11 // pred_fallthru
          _
      $region12: #{tpu_custom_call.1} parent=5 // pred_fallthru
        _
      %p165 = scmp.lt.s32.totalorder %s17, 2
      // Predicated region
      $region25: #{tpu_custom_call.1} parent=5 // pred_check
        %p166 = pneg %p165
      $region26: #{tpu_custom_call.1} parent=5 // pred_check_branch
        %168 = sbr.rel (%p166) target = $region28
      $region27: #{tpu_custom_call.1} parent=5 // pred_region
        // Predicated region
        $region29: #{tpu_custom_call.1} parent=27 // pred_check
          %p169 = pneg %p37
        $region30: #{tpu_custom_call.1} parent=27 // pred_check_branch
          %171 = sbr.rel (%p169) target = $region32
        $region31: #{tpu_custom_call.1} parent=27 // pred_region
          %s172 = sand.u32 %s27, 1
          %s173 = scalar_lea.sflag [#allocation4], %s172
          %s174 = sand.u32 %s27, 1
          %s175 = smul.addr %s174, 4
          %s176 = scalar_lea.vmem [#allocation3], %s175
          %178 = vsyncadd %s173, 0
          %s179 = smul.addr %s17, 2
          %s180 = smul.addr %s179, 2
          %s181 = scalar_lea.hbm %s0, %s180
          %s183 = sshll.u32 %s181, 4
          %s184 = int_to_ptr.hbm [resolvable:$true] %s183
          %s185 = sshll.u32 %s176, 4
          %s186 = int_to_ptr.vmem [resolvable:$true] %s185
          %188 = dma.hbm_to_vmem [thread:$0]  %s184, 64, %s186, %s173
        $region32: #{tpu_custom_call.1} parent=27 // pred_fallthru
          _
      $region28: #{tpu_custom_call.1} parent=5 // pred_fallthru
        _
      %p189 = scmp.le.s32.totalorder 1, %s17
      %p190 = scmp.lt.s32.totalorder %s17, 3
      %p191 = pnand %p189, %p190
      %p192 = pneg %p191
      // Predicated region
      $region33: #{tpu_custom_call.1} parent=5 // pred_check
        _
      $region34: #{tpu_custom_call.1} parent=5 // pred_check_branch
        %194 = sbr.rel (%p191) target = $region36
      $region35: #{tpu_custom_call.1} parent=5 // pred_region
        %s195 = ssub.s32 %s17, 1
        %s196 = sand.u32 %s30, 1
        %s197 = scalar_lea.sflag [#allocation4], %s196
        %s198 = sand.u32 %s30, 1
        %s199 = smul.addr %s198, 4
        %s200 = scalar_lea.vmem [#allocation3], %s199
        // Predicated region
        $region37: #{tpu_custom_call.1} parent=35 // pred_check
          %p201 = pneg %p43
        $region38: #{tpu_custom_call.1} parent=35 // pred_check_branch
          %203 = sbr.rel (%p201) target = $region40
        $region39: #{tpu_custom_call.1} parent=35 // pred_region
          %205 = dma.done %s197, 64
        $region40: #{tpu_custom_call.1} parent=35 // pred_fallthru
          _
        // Predicated region
        $region41: #{tpu_custom_call.1} parent=35 // pred_check
          %p206 = pneg %p106
        $region42: #{tpu_custom_call.1} parent=35 // pred_check_branch
          %208 = sbr.rel (%p206) target = $region44
        $region43: #{tpu_custom_call.1} parent=35 // pred_region
          %210 = dma.done [#allocation7], 256
        $region44: #{tpu_custom_call.1} parent=35 // pred_fallthru
          _
        %s211 = sand.u32 %s30, 1
        %s212 = scalar_lea.sflag [#allocation4], %s211
        %s213 = sand.u32 %s30, 1
        %s214 = smul.addr %s213, 4
        %s215 = scalar_lea.vmem [#allocation3], %s214
        %p216 = pneg %p43
        %p217 = pneg %p40
        %p218 = pneg %p64
        %p219 = pneg %p61
        %p220 = pneg %p85
        %p221 = pneg %p82
        %p222 = pneg %p106
        %p223 = pneg %p103
        %p224 = pneg %p132
        %p225 = pneg %p129
        %s226 = sand.u32 %s119, 1
        %s227 = scalar_lea.sflag [#allocation5], %s226
        %s228 = sand.u32 %s119, 1
        %s229 = smul.addr %s228, 8
        %s230 = scalar_lea.vmem [#allocation8], %s229
        %232 = vst [vmem:[#allocation2] sm:$0xff] 0
        %233 = vst [vmem:[#allocation2 + $0x8] sm:$0xff] 0
        %234 = vst [vmem:[#allocation2 + $0x10] sm:$0xff] 0
        %235 = vst [vmem:[#allocation2 + $0x18] sm:$0xff] 0
        %236 = vst [vmem:[#allocation2 + $0x20] sm:$0xff] 0
        %237 = vst [vmem:[#allocation2 + $0x28] sm:$0xff] 0
        %238 = vst [vmem:[#allocation2 + $0x30] sm:$0xff] 0
        %239 = vst [vmem:[#allocation2 + $0x38] sm:$0xff] 0
        %240 = vst [vmem:[#allocation2 + $0x40] sm:$0xff] 0
        %241 = vst [vmem:[#allocation2 + $0x48] sm:$0xff] 0
        %242 = vst [vmem:[#allocation2 + $0x50] sm:$0xff] 0
        %243 = vst [vmem:[#allocation2 + $0x58] sm:$0xff] 0
        %244 = vst [vmem:[#allocation2 + $0x60] sm:$0xff] 0
        %245 = vst [vmem:[#allocation2 + $0x68] sm:$0xff] 0
        %246 = vst [vmem:[#allocation2 + $0x70] sm:$0xff] 0
        %247 = vst [vmem:[#allocation2 + $0x78] sm:$0xff] 0
        %248 = vst [vmem:[#allocation2 + $0x80] sm:$0xff] 0
        %249 = vst [vmem:[#allocation2 + $0x88] sm:$0xff] 0
        %v250 = vld [vmem:[#allocation6] sm:$0xff]
        %v251 = vld [vmem:[#allocation6 + $0x8] sm:$0xff]
        %v252 = vld [vmem:[%s200] sm:$0xf]
        %v253 = vunpack.c.l.bf16 %v252
        %255 = vst [vmem:[#allocation1] ss:$2 sm:$0xff] %v253
        %v256 = vld.sshfl [vmem:[#allocation1] sm:$0xff pattern:$0x75316420]
        %v257 = vld.sshfl [vmem:[#allocation1 + $0x8] sm:$0xff pattern:$0x75316420]
        %260 = vrot.lane.b32.xlu0 %v256, 17
        %v261 = vpop.permute.xlu0 %260
        %262 = vrot.lane.b32.xlu0 %v257, 17
        %v263 = vpop.permute.xlu0 %262
        %v264 = vlaneseq
        %v265 = vand.u32 %v264, 127
        %vm266 = vcmp.lt.s32.totalorder %v265, 17
        %v267 = vsel %vm266, %v261, %v263
        %v268 = vsel %vm266, %v263, %v261
        %v269 = vperm.slane %v250, 0
        %v270 = vperm.slane %v251, 0
        %v271 = vmul.f32 %v268, %v269
        %v272 = vmul.f32 %v267, %v270
        %v273 = vpack.c.bf16 %v272, %v271
        %274 = vst [vmem:[#allocation2] sm:$0x33] %v273
        %275 = vst [vmem:[#allocation1] ss:$2 sm:$0xff] %v253
        %v276 = vld.sshfl [vmem:[#allocation1] sm:$0xff pattern:$0x75316420]
        %v277 = vld.sshfl [vmem:[#allocation1 + $0x8] sm:$0xff pattern:$0x75316420]
        %280 = vrot.lane.b32.xlu0 %v276, 16
        %v281 = vpop.permute.xlu0 %280
        %282 = vrot.lane.b32.xlu0 %v277, 16
        %v283 = vpop.permute.xlu0 %282
        %vm284 = vcmp.lt.s32.totalorder %v265, 16
        %v285 = vsel %vm284, %v281, %v283
        %v286 = vsel %vm284, %v283, %v281
        %v287 = vperm.slane %v250, 1
        %v288 = vperm.slane %v251, 1
        %v289 = vmul.f32 %v286, %v287
        %v290 = vmul.f32 %v285, %v288
        %v291 = vpack.c.bf16 %v290, %v289
        %292 = vst [vmem:[#allocation2 + $0x10] sm:$0x33] %v291
        %293 = vst [vmem:[#allocation1] ss:$2 sm:$0xff] %v253
        %v294 = vld.sshfl [vmem:[#allocation1] sm:$0xff pattern:$0x75316420]
        %v295 = vld.sshfl [vmem:[#allocation1 + $0x8] sm:$0xff pattern:$0x75316420]
        %298 = vrot.lane.b32.xlu0 %v294, 15
        %v299 = vpop.permute.xlu0 %298
        %300 = vrot.lane.b32.xlu0 %v295, 15
        %v301 = vpop.permute.xlu0 %300
        %vm302 = vcmp.lt.s32.totalorder %v265, 15
        %v303 = vsel %vm302, %v299, %v301
        %v304 = vsel %vm302, %v301, %v299
        %v305 = vperm.slane %v250, 2
        %v306 = vperm.slane %v251, 2
        %v307 = vmul.f32 %v304, %v305
        %v308 = vmul.f32 %v303, %v306
        %v309 = vpack.c.bf16 %v308, %v307
        %310 = vst [vmem:[#allocation2 + $0x20] sm:$0x33] %v309
        %311 = vst [vmem:[#allocation1] ss:$2 sm:$0xff] %v253
        %v312 = vld.sshfl [vmem:[#allocation1] sm:$0xff pattern:$0x75316420]
        %v313 = vld.sshfl [vmem:[#allocation1 + $0x8] sm:$0xff pattern:$0x75316420]
        %316 = vrot.lane.b32.xlu0 %v312, 1
        %v317 = vpop.permute.xlu0 %316
        %318 = vrot.lane.b32.xlu0 %v313, 1
        %v319 = vpop.permute.xlu0 %318
        %vm320 = vcmp.lt.s32.totalorder %v265, 1
        %v321 = vsel %vm320, %v317, %v319
        %v322 = vsel %vm320, %v319, %v317
        %v323 = vperm.slane %v250, 3
        %v324 = vperm.slane %v251, 3
        %v325 = vmul.f32 %v322, %v323
        %v326 = vmul.f32 %v321, %v324
        %v327 = vpack.c.bf16 %v326, %v325
        %328 = vst [vmem:[#allocation2 + $0x30] sm:$0x33] %v327
        %330 = vst [vmem:[#allocation1] ss:$2 sm:$0xff] %v252
        %v331 = vld.sshfl [vmem:[#allocation1] sm:$0xff pattern:$0x75643120]
        %333 = vst [vmem:[#allocation2 + $0x40] sm:$0x33] %v331
        %334 = vst [vmem:[#allocation1] ss:$2 sm:$0xff] %v253
        %v335 = vld.sshfl [vmem:[#allocation1] sm:$0xff pattern:$0x75316420]
        %v336 = vld.sshfl [vmem:[#allocation1 + $0x8] sm:$0xff pattern:$0x75316420]
        %339 = vrot.lane.b32.xlu0 %v335, 127
        %v340 = vpop.permute.xlu0 %339
        %341 = vrot.lane.b32.xlu0 %v336, 127
        %v342 = vpop.permute.xlu0 %341
        %vm343 = vcmp.lt.s32.totalorder %v265, 127
        %v344 = vsel %vm343, %v340, %v342
        %v345 = vsel %vm343, %v342, %v340
        %v346 = vperm.slane %v250, 4
        %v347 = vperm.slane %v251, 4
        %v348 = vmul.f32 %v344, %v346
        %v349 = vmul.f32 %v345, %v347
        %v350 = vpack.c.bf16 %v349, %v348
        %351 = vst [vmem:[#allocation2 + $0x50] sm:$0x33] %v350
        %352 = vst [vmem:[#allocation1] ss:$2 sm:$0xff] %v253
        %v353 = vld.sshfl [vmem:[#allocation1] sm:$0xff pattern:$0x75316420]
        %v354 = vld.sshfl [vmem:[#allocation1 + $0x8] sm:$0xff pattern:$0x75316420]
        %357 = vrot.lane.b32.xlu0 %v353, 113
        %v358 = vpop.permute.xlu0 %357
        %359 = vrot.lane.b32.xlu0 %v354, 113
        %v360 = vpop.permute.xlu0 %359
        %vm361 = vcmp.lt.s32.totalorder %v265, 113
        %v362 = vsel %vm361, %v358, %v360
        %v363 = vsel %vm361, %v360, %v358
        %v364 = vperm.slane %v250, 5
        %v365 = vperm.slane %v251, 5
        %v366 = vmul.f32 %v362, %v364
        %v367 = vmul.f32 %v363, %v365
        %v368 = vpack.c.bf16 %v367, %v366
        %369 = vst [vmem:[#allocation2 + $0x60] sm:$0x33] %v368
        %370 = vst [vmem:[#allocation1] ss:$2 sm:$0xff] %v253
        %v371 = vld.sshfl [vmem:[#allocation1] sm:$0xff pattern:$0x75316420]
        %v372 = vld.sshfl [vmem:[#allocation1 + $0x8] sm:$0xff pattern:$0x75316420]
        %375 = vrot.lane.b32.xlu0 %v371, 112
        %v376 = vpop.permute.xlu0 %375
        %377 = vrot.lane.b32.xlu0 %v372, 112
        %v378 = vpop.permute.xlu0 %377
        %vm379 = vcmp.lt.s32.totalorder %v265, 112
        %v380 = vsel %vm379, %v376, %v378
        %v381 = vsel %vm379, %v378, %v376
        %v382 = vperm.slane %v250, 6
        %v383 = vperm.slane %v251, 6
        %v384 = vmul.f32 %v380, %v382
        %v385 = vmul.f32 %v381, %v383
        %v386 = vpack.c.bf16 %v385, %v384
        %387 = vst [vmem:[#allocation2 + $0x70] sm:$0x33] %v386
        %388 = vst [vmem:[#allocation1] ss:$2 sm:$0xff] %v253
        %v389 = vld.sshfl [vmem:[#allocation1] sm:$0xff pattern:$0x75316420]
        %v390 = vld.sshfl [vmem:[#allocation1 + $0x8] sm:$0xff pattern:$0x75316420]
        %393 = vrot.lane.b32.xlu0 %v389, 111
        %v394 = vpop.permute.xlu0 %393
        %395 = vrot.lane.b32.xlu0 %v390, 111
        %v396 = vpop.permute.xlu0 %395
        %vm397 = vcmp.lt.s32.totalorder %v265, 111
        %v398 = vsel %vm397, %v394, %v396
        %v399 = vsel %vm397, %v396, %v394
        %v400 = vperm.slane %v250, 7
        %v401 = vperm.slane %v251, 7
        %v402 = vmul.f32 %v398, %v400
        %v403 = vmul.f32 %v399, %v401
        %v404 = vpack.c.bf16 %v403, %v402
        %405 = vst [vmem:[#allocation2 + $0x80] sm:$0x33] %v404
        %v406 = vld [vmem:[%s1] sm:$0xf]
        %v407 = vld [vmem:[#allocation2] sm:$0xff]
        %v408 = vld [vmem:[#allocation2 + $0x8] sm:$0xff]
        %v409 = vld [vmem:[#allocation2 + $0x10] sm:$0xff]
        %v410 = vld [vmem:[#allocation2 + $0x18] sm:$0xff]
        %v411 = vld [vmem:[#allocation2 + $0x20] sm:$0xff]
        %v412 = vld [vmem:[#allocation2 + $0x28] sm:$0xff]
        %v413 = vld [vmem:[#allocation2 + $0x30] sm:$0xff]
        %v414 = vld [vmem:[#allocation2 + $0x38] sm:$0xff]
        %v415 = vld [vmem:[#allocation2 + $0x40] sm:$0xff]
        %v416 = vld [vmem:[#allocation2 + $0x48] sm:$0xff]
        %v417 = vld [vmem:[#allocation2 + $0x50] sm:$0xff]
        %v418 = vld [vmem:[#allocation2 + $0x58] sm:$0xff]
        %v419 = vld [vmem:[#allocation2 + $0x60] sm:$0xff]
        %v420 = vld [vmem:[#allocation2 + $0x68] sm:$0xff]
        %v421 = vld [vmem:[#allocation2 + $0x70] sm:$0xff]
        %v422 = vld [vmem:[#allocation2 + $0x78] sm:$0xff]
        %v423 = vld [vmem:[#allocation2 + $0x80] sm:$0xff]
        %v424 = vld [vmem:[#allocation2 + $0x88] sm:$0xff]
        %v425 = vld [vmem:[%s2] sm:$0xf]
        %427 = vset.pattern.permute.xlu0 0
        %428 = vperm.xlu0 %427, %v425
        %v429 = vpop.permute.xlu0 %428
        %432 = vst [vmem:[#allocation1] ss:$4 sm:$0xff] %v406
        %v433 = vld.sshfl [vmem:[#allocation1] sm:$0xff pattern:$0x73625140]
        %v434 = vld.sshfl [vmem:[#allocation1 + $0x8] sm:$0xff pattern:$0x73625140]
        %v454 = vunpack.c.l.b16 %v407
        %v455 = vunpack.c.h.b16 %v407
        %v456 = vunpack.c.l.b16 %v408
        %v457 = vunpack.c.h.b16 %v408
        %v458 = vunpack.c.l.b16 %v409
        %v459 = vunpack.c.h.b16 %v409
        %v460 = vunpack.c.l.b16 %v410
        %v461 = vunpack.c.h.b16 %v410
        %v462 = vunpack.c.l.b16 %v411
        %v463 = vunpack.c.h.b16 %v411
        %v464 = vunpack.c.l.b16 %v412
        %v465 = vunpack.c.h.b16 %v412
        %v466 = vunpack.c.l.b16 %v413
        %v467 = vunpack.c.h.b16 %v413
        %v468 = vunpack.c.l.b16 %v414
        %v469 = vunpack.c.h.b16 %v414
        %v470 = vunpack.c.l.b16 %v415
        %v471 = vunpack.c.h.b16 %v415
        %v472 = vunpack.c.l.b16 %v416
        %v473 = vunpack.c.h.b16 %v416
        %v474 = vunpack.c.l.b16 %v417
        %v475 = vunpack.c.h.b16 %v417
        %v476 = vunpack.c.l.b16 %v418
        %v477 = vunpack.c.h.b16 %v418
        %v478 = vunpack.c.l.b16 %v419
        %v479 = vunpack.c.h.b16 %v419
        %v480 = vunpack.c.l.b16 %v420
        %v481 = vunpack.c.h.b16 %v420
        %v482 = vunpack.c.l.b16 %v421
        %v483 = vunpack.c.h.b16 %v421
        %v484 = vunpack.c.l.b16 %v422
        %v485 = vunpack.c.h.b16 %v422
        %v486 = vunpack.c.l.b16 %v423
        %v487 = vunpack.c.h.b16 %v423
        %v488 = vunpack.c.l.b16 %v424
        %v489 = vunpack.c.h.b16 %v424
        %v490 = vpack.c.b16 %v456, %v454
        %v491 = vpack.c.b16 %v457, %v455
        %v492 = vpack.c.b16 %v460, %v458
        %v493 = vpack.c.b16 %v461, %v459
        %v494 = vpack.c.b16 %v464, %v462
        %v495 = vpack.c.b16 %v465, %v463
        %v496 = vpack.c.b16 %v468, %v466
        %v497 = vpack.c.b16 %v469, %v467
        %v498 = vpack.c.b16 %v472, %v470
        %v499 = vpack.c.b16 %v473, %v471
        %v500 = vpack.c.b16 %v476, %v474
        %v501 = vpack.c.b16 %v477, %v475
        %v502 = vpack.c.b16 %v480, %v478
        %v503 = vpack.c.b16 %v481, %v479
        %v504 = vpack.c.b16 %v484, %v482
        %v505 = vpack.c.b16 %v485, %v483
        %v506 = vpack.c.b16 %v488, %v486
        %v507 = vpack.c.b16 %v489, %v487
        %vm526 = vcmask 130048
        %v527 = vsel %vm526, %v434, 0
        %529 = vmatpush.bf16.msra.mxu0 %v504
        %530 = vmatpush.bf16.msra.mxu0 %v502
        %531 = vmatpush.bf16.msra.mxu0 %v500
        %532 = vmatpush.bf16.msra.mxu0 %v498
        %533 = vmatpush.bf16.msra.mxu0 %v496
        %534 = vmatpush.bf16.msra.mxu0 %v494
        %535 = vmatpush.bf16.msra.mxu0 %v492
        %536 = vmatpush.bf16.msra.mxu0 %v490
        %537 = vmatmul.bf16.gmra.mxu0 %v433
        %v538 = vpop.f32.mrf.mxu0
        %v539 = vadd.f32 %v429, %v538
        %v540 = vpop.f32.mrf.mxu0
        %541 = vdwg.mxu0
        %542 = vmatpush.bf16.msra.mxu0 0
        %543 = vmatpush.bf16.msra.mxu0 0
        %544 = vmatpush.bf16.msra.mxu0 0
        %545 = vmatpush.bf16.msra.mxu0 0
        %546 = vmatpush.bf16.msra.mxu0 0
        %547 = vmatpush.bf16.msra.mxu0 0
        %548 = vmatpush.bf16.msra.mxu0 0
        %549 = vmatpush.bf16.msra.mxu0 %v506
        %550 = vmatmul.bf16.gmra.mxu0 %v527
        %v551 = vpop.f32.mrf.mxu0
        %v552 = vadd.f32 %v539, %v551
        %v553 = vpop.f32.mrf.mxu0
        %554 = vdwg.mxu0
        %555 = vmatpush.bf16.msra.mxu0 %v505
        %556 = vmatpush.bf16.msra.mxu0 %v503
        %557 = vmatpush.bf16.msra.mxu0 %v501
        %558 = vmatpush.bf16.msra.mxu0 %v499
        %559 = vmatpush.bf16.msra.mxu0 %v497
        %560 = vmatpush.bf16.msra.mxu0 %v495
        %561 = vmatpush.bf16.msra.mxu0 %v493
        %562 = vmatpush.bf16.msra.mxu0 %v491
        %563 = vmatmul.bf16.gmra.mxu0 %v433
        %v564 = vpop.f32.mrf.mxu0
        %v565 = vadd.f32 %v429, %v564
        %v566 = vpop.f32.mrf.mxu0
        %567 = vdwg.mxu0
        %568 = vmatpush.bf16.msra.mxu0 0
        %569 = vmatpush.bf16.msra.mxu0 0
        %570 = vmatpush.bf16.msra.mxu0 0
        %571 = vmatpush.bf16.msra.mxu0 0
        %572 = vmatpush.bf16.msra.mxu0 0
        %573 = vmatpush.bf16.msra.mxu0 0
        %574 = vmatpush.bf16.msra.mxu0 0
        %575 = vmatpush.bf16.msra.mxu0 %v507
        %576 = vmatmul.bf16.gmra.mxu0 %v527
        %v577 = vpop.f32.mrf.mxu0
        %v578 = vadd.f32 %v565, %v577
        %v579 = vpop.f32.mrf.mxu0
        %580 = vdwg.mxu0
        %v581 = vxor.u32 %v552, 2147483648
        %v582 = vxor.u32 %v578, 2147483648
        %v583 = vmul.f32 %v581, 1.442695
        %v584 = vpow.pop %v583
        %v585 = vmul.f32 %v582, 1.442695
        %v586 = vpow.pop %v585
        %v587 = vadd.f32 %v584, 1.0
        %v588 = vadd.f32 %v586, 1.0
        %v589 = vrcp.pop %v587
        %v590 = vmul.f32 %v587, %v589
        %v591 = vsub.f32 1.0, %v590
        %v592 = vmul.f32 %v589, %v591
        %v593 = vadd.f32 %v589, %v592
        %vm594 = vweird.f32 %v587
        %vm595 = vweird.f32 %v589
        %vm596 = vmor %vm594, %vm595
        %v597 = vsel %vm596, %v589, %v593
        %v598 = vand.u32 2147483647, %v587
        %vm599 = vcmp.eq.f32.partialorder %v598, 8.507059e+37
        %v600 = vand.u32 %v587, 2147483648
        %v601 = vor.u32 1.1754944e-38, %v600
        %v602 = vsel %vm599, %v601, %v597
        %v603 = vmul.f32 1.0, %v602
        %v604 = vrcp.pop %v588
        %v605 = vmul.f32 %v588, %v604
        %v606 = vsub.f32 1.0, %v605
        %v607 = vmul.f32 %v604, %v606
        %v608 = vadd.f32 %v604, %v607
        %vm609 = vweird.f32 %v588
        %vm610 = vweird.f32 %v604
        %vm611 = vmor %vm609, %vm610
        %v612 = vsel %vm611, %v604, %v608
        %v613 = vand.u32 2147483647, %v588
        %vm614 = vcmp.eq.f32.partialorder %v613, 8.507059e+37
        %v615 = vand.u32 %v588, 2147483648
        %v616 = vor.u32 1.1754944e-38, %v615
        %v617 = vsel %vm614, %v616, %v612
        %v618 = vmul.f32 1.0, %v617
        %v621 = vrot.slane %v618, 4
        %vm622 = vcmask 1043456
        %v623 = vsel %vm622, %v603, %v621
        %625 = vst [vmem:[%s230] sm:$0xff] %v623
        %s626 = sand.u32 %s119, 1
        %s627 = scalar_lea.sflag [#allocation5], %s626
        %s628 = sand.u32 %s119, 1
        %s629 = smul.addr %s628, 8
        %s630 = scalar_lea.vmem [#allocation8], %s629
        // Predicated region
        $region45: #{tpu_custom_call.1} parent=35 // pred_check
          %p631 = pneg %p129
        $region46: #{tpu_custom_call.1} parent=35 // pred_check_branch
          %633 = sbr.rel (%p631) target = $region48
        $region47: #{tpu_custom_call.1} parent=35 // pred_region
          %635 = vsyncadd %s627, 0
          %s636 = smul.addr %s22, 2
          %s637 = smul.addr %s636, 4
          %s638 = scalar_lea.hbm %s4, %s637
          %s640 = sshll.u32 %s630, 4
          %s641 = int_to_ptr.vmem [resolvable:$true] %s640
          %s642 = sshll.u32 %s638, 4
          %s643 = int_to_ptr.hbm [resolvable:$true] %s642
          %645 = dma.vmem_to_hbm [thread:$0]  %s641, 128, %s643, %s627
        $region48: #{tpu_custom_call.1} parent=35 // pred_fallthru
          _
      $region36: #{tpu_custom_call.1} parent=5 // pred_fallthru
        _
      %p646 = scmp.le.s32.totalorder 2, %s17
      // Predicated region
      $region49: #{tpu_custom_call.1} parent=5 // pred_check
        %p647 = pneg %p646
      $region50: #{tpu_custom_call.1} parent=5 // pred_check_branch
        %649 = sbr.rel (%p647) target = $region52
      $region51: #{tpu_custom_call.1} parent=5 // pred_region
        %s650 = ssub.s32 %s17, 2
        // Predicated region
        $region53: #{tpu_custom_call.1} parent=51 // pred_check
          %p651 = pneg %p135
        $region54: #{tpu_custom_call.1} parent=51 // pred_check_branch
          %653 = sbr.rel (%p651) target = $region56
        $region55: #{tpu_custom_call.1} parent=51 // pred_region
          %s654 = sand.u32 %s120, 1
          %s655 = scalar_lea.sflag [#allocation5], %s654
          %s656 = sand.u32 %s120, 1
          %s657 = smul.addr %s656, 8
          %s658 = scalar_lea.vmem [#allocation8], %s657
          %660 = dma.done %s655, 128
        $region56: #{tpu_custom_call.1} parent=51 // pred_fallthru
          _
      $region52: #{tpu_custom_call.1} parent=5 // pred_fallthru
        _
    $region6: #{tpu_custom_call.1} parent=1 // loop_footer
      %s21 = sadd.s32 1, %s17
    $region7: #{tpu_custom_call.1} parent=1 // loop_footer_branch
      %16 = sbr.rel target = $region3
    $region8: #{tpu_custom_call.1} parent=1 // loop_exit
      _
    %661 = vsyncpa [#allocation4], 1
    %s662 = scalar_lea.sflag [#allocation4], 1
    %663 = vsyncpa %s662, 1
    %664 = vsyncpa [#allocation7], 1
    %665 = vsyncpa [#allocation5], 1
    %s666 = scalar_lea.sflag [#allocation5], 1
    %667 = vsyncpa %s666, 1

</llo_original>
